<compile_context>
chip_gen: v6e
topology: v6e:2x2x1
jax: 0.10.0
libtpu: 0.0.40
codegen_flags: <defaults>
</compile_context>

<pallas_src>
import jax
import jax.numpy as jnp
from jax import lax
from jax.experimental import pallas as pl
from jax.experimental.pallas import tpu as pltpu


# ---------------------------------------------------------------------------
# Fused kernel: class-tiled softmax CE classifier + angular prototypical loss
# ---------------------------------------------------------------------------
def _softmaxproto_kernel(xf_ref, x0_ref, x1_ref, w_ref, b_ref, lbl_ref, wb_ref,
                         loss_ref, prec_ref, m_acc, s_acc, t_acc):
    j = pl.program_id(0)
    nt = pl.num_programs(0)
    two_n, _ = xf_ref.shape
    n = x0_ref.shape[0]
    tile_c = w_ref.shape[1]

    @pl.when(j == 0)
    def _init():
        m_acc[...] = jnp.full_like(m_acc, -jnp.inf)
        s_acc[...] = jnp.zeros_like(s_acc)
        t_acc[...] = jnp.zeros_like(t_acc)

    # ---- classifier logits for this class tile: bf16 x bf16, f32 accumulate ----
    feats_bf = xf_ref[...].astype(jnp.bfloat16)                 # (2N, D)
    logits = jnp.dot(feats_bf, w_ref[...],
                     preferred_element_type=jnp.float32)        # (2N, Ct)
    logits = logits + b_ref[...].astype(jnp.float32)

    # ---- online logsumexp / running max / target-logit accumulation ----
    m_prev = m_acc[...]
    local_max = jnp.max(logits, axis=1, keepdims=True)
    m_new = jnp.maximum(m_prev, local_max)
    s_acc[...] = s_acc[...] * jnp.exp(m_prev - m_new) + jnp.sum(
        jnp.exp(logits - m_new), axis=1, keepdims=True)

    col = lax.broadcasted_iota(jnp.int32, logits.shape, 1) + j * tile_c
    onehot = (col == lbl_ref[...]).astype(jnp.float32)          # labels < C, padding never hit
    t_acc[...] = t_acc[...] + jnp.sum(logits * onehot, axis=1, keepdims=True)
    m_acc[...] = m_new

    # ---- finalize on last class tile: CE loss, prec1, AngleProto, outputs ----
    @pl.when(j == nt - 1)
    def _finalize():
        lse = m_acc[...] + jnp.log(s_acc[...])
        loss_s = jnp.sum(lse - t_acc[...]) * (1.0 / two_n)
        correct = jnp.sum((t_acc[...] >= m_acc[...]).astype(jnp.float32))
        prec1 = correct * (100.0 / two_n)

        # AngleProto: normalize rows (EUP rsqrt) -> one f32 MXU matmul gives cos
        x0 = x0_ref[...].astype(jnp.float32)                    # (N, D) positives
        x1 = x1_ref[...].astype(jnp.float32)                    # (N, D) anchors (= mean of 1 utt)
        inv0 = lax.rsqrt(jnp.maximum(jnp.sum(x0 * x0, axis=1, keepdims=True), 1e-16))
        inv1 = lax.rsqrt(jnp.maximum(jnp.sum(x1 * x1, axis=1, keepdims=True), 1e-16))
        pos_hat = x0 * inv0
        anc_hat = x1 * inv1

        w_ap = jnp.maximum(wb_ref[0], 1e-6)                     # clamp as in AngleProto
        b_ap = wb_ref[1]

        dn = (((1,), (1,)), ((), ()))                           # cos[i,j] = <pos_i, anc_j>
        cos = lax.dot_general(pos_hat, anc_hat, dn, preferred_element_type=jnp.float32)
        scaled = cos * w_ap + b_ap                              # (N, N)
        # target = scaled[i, i], computed directly (no (N,N) one-hot passes)
        diag_tgt = jnp.sum(pos_hat * anc_hat, axis=1, keepdims=True) * w_ap + b_ap

        rm = jnp.max(scaled, axis=1, keepdims=True)
        lse_p = rm + jnp.log(jnp.sum(jnp.exp(scaled - rm), axis=1, keepdims=True))
        loss_p = jnp.sum(lse_p - diag_tgt) * (1.0 / n)

        loss_ref[0, 0] = loss_s + loss_p
        prec_ref[0, 0] = prec1


# ---------------------------------------------------------------------------
# Wrapper
# ---------------------------------------------------------------------------
def softmaxproto_forward(x, label, W, b, w_ap, b_ap, *, tile_c=512):
    """x: (N, 2, D), label: (N,) int.  Returns (nlossS + nlossP, prec1)."""
    N, M, D = x.shape
    assert M == 2, "SoftmaxProto expects exactly 2 utterances per speaker"
    C = W.shape[1]
    two_n = 2 * N

    # class tile: multiple of 128, capped by the 128-rounded class count
    c128 = ((C + 127) // 128) * 128
    tc = max(128, min((tile_c // 128) * 128, c128))
    c_pad = ((C + tc - 1) // tc) * tc
    num_tiles = c_pad // tc

    # pad classes: W columns with 0, bias with -1e30 (padded logits never win)
    W_f = W.astype(jnp.float32)
    b_f = b.astype(jnp.float32)
    if c_pad > C:
        W_f = jnp.pad(W_f, ((0, 0), (0, c_pad - C)))
        b_f = jnp.pad(b_f, (0, c_pad - C), constant_values=-1e30)
    W_k = W_f.astype(jnp.bfloat16)                  # bf16 MXU operand (half HBM/VMEM bytes)
    b_row = b_f.reshape(1, c_pad)

    x_flat = x.reshape(two_n, D)                    # torch x.reshape(-1, D) row order
    x0 = x[:, 0, :]                                 # positives
    x1 = x[:, 1, :]                                 # anchors (mean over the single other utt)
    lbl2 = jnp.repeat(label.astype(jnp.int32), 2).reshape(two_n, 1)  # repeat_interleave(2)
    wb = jnp.array([w_ap, b_ap], dtype=jnp.float32)

    # VMEM budget sized to the actual resident buffers (v5e 16 MiB / v6e-v7x 32 MiB defaults)
    est = (4 * two_n * D * 4            # x_flat + x0 + x1 (+ slack), f32
           + 2 * D * tc * 2             # double-buffered bf16 W tile
           + 2 * tc * 4                 # double-buffered bias tile
           + 4 * two_n * tc * 4         # logits + exp temporaries
           + 4 * N * N * 4              # cos / scaled temporaries
           + (1 << 20))
    vmem_limit = int(min(64 * 2**20, max(16 * 2**20, 2 * est)))

    grid_spec = pltpu.PrefetchScalarGridSpec(
        num_scalar_prefetch=0,
        grid=(num_tiles,),
        in_specs=[
            pl.BlockSpec((two_n, D), lambda j: (0, 0)),                 # x_flat (resident)
            pl.BlockSpec((N, D), lambda j: (0, 0)),                     # x0 (resident)
            pl.BlockSpec((N, D), lambda j: (0, 0)),                     # x1 (resident)
            pl.BlockSpec((D, tc), lambda j: (0, j)),                    # W class tile (bf16)
            pl.BlockSpec((1, tc), lambda j: (0, j)),                    # bias class tile
            pl.BlockSpec((two_n, 1), lambda j: (0, 0)),                 # labels (resident)
            pl.BlockSpec((2,), lambda j: (0,),
                         memory_space=pltpu.MemorySpace.SMEM),          # (w_ap, b_ap)
        ],
        out_specs=(
            pl.BlockSpec((1, 1), lambda j: (0, 0), memory_space=pltpu.MemorySpace.SMEM),
            pl.BlockSpec((1, 1), lambda j: (0, 0), memory_space=pltpu.MemorySpace.SMEM),
        ),
        scratch_shapes=[
            pltpu.VMEM((two_n, 1), jnp.float32),    # running row max
            pltpu.VMEM((two_n, 1), jnp.float32),    # running sum-exp
            pltpu.VMEM((two_n, 1), jnp.float32),    # target logit
        ],
    )

    loss, prec = pl.pallas_call(
        _softmaxproto_kernel,
        out_shape=(jax.ShapeDtypeStruct((1, 1), jnp.float32),
                   jax.ShapeDtypeStruct((1, 1), jnp.float32)),
        grid_spec=grid_spec,
        compiler_params=pltpu.CompilerParams(
            dimension_semantics=("arbitrary",),     # class axis is a reduction
            vmem_limit_bytes=vmem_limit,
        ),
    )(x_flat, x0, x1, W_k, b_row, lbl2, wb)
    return loss[0, 0], prec[0, 0]


# ---------------------------------------------------------------------------
# Pure-JAX reference (same bf16 operand quantization as the kernel's matmul)
# ---------------------------------------------------------------------------
def _reference(x, label, W, b, w_ap, b_ap):
    N, M, D = x.shape
    W_q = W.astype(jnp.bfloat16).astype(jnp.float32)
    x_flat = x.reshape(-1, D)
    x_q = x_flat.astype(jnp.bfloat16).astype(jnp.float32)
    lbl2 = jnp.repeat(label, M)

    logits = jnp.dot(x_q, W_q, precision=lax.Precision.HIGHEST) + b
    lse = jax.scipy.special.logsumexp(logits, axis=1)
    tgt = logits[jnp.arange(logits.shape[0]), lbl2]
    loss_s = jnp.mean(lse - tgt)
    prec1 = jnp.mean((jnp.argmax(logits, axis=1) == lbl2).astype(jnp.float32)) * 100.0

    pos = x[:, 0, :]
    anc = jnp.mean(x[:, 1:, :], axis=1)
    pos_n = pos / jnp.maximum(jnp.linalg.norm(pos, axis=1, keepdims=True), 1e-8)
    anc_n = anc / jnp.maximum(jnp.linalg.norm(anc, axis=1, keepdims=True), 1e-8)
    cos = jnp.dot(pos_n, anc_n.T, precision=lax.Precision.HIGHEST)
    scaled = cos * max(w_ap, 1e-6) + b_ap
    lse2 = jax.scipy.special.logsumexp(scaled, axis=1)
    loss_p = jnp.mean(lse2 - jnp.diag(scaled))
    return loss_s + loss_p, prec1


if __name__ == "__main__":
    # Small shapes consistent with the module: N=8 speakers x 2 utts, D=64,
    # C=1015 classes (the module default), padded to 1024 -> 2 class tiles.
    N, D, C = 8, 64, 1015
    init_w, init_b = 10.0, -5.0

    key = jax.random.PRNGKey(0)
    kx, kw, kb, kl = jax.random.split(key, 4)
    x = jax.random.normal(kx, (N, 2, D), dtype=jnp.float32)
    label = jax.random.randint(kl, (N,), 0, C, dtype=jnp.int32)

    bound = 1.0 / (D ** 0.5)
    W = jax.random.uniform(kw, (D, C), minval=-bound, maxval=bound, dtype=jnp.float32)
    b = jax.random.uniform(kb, (C,), minval=-bound, maxval=bound, dtype=jnp.float32)

    loss, prec1 = softmaxproto_forward(x, label, W, b, init_w, init_b)
    loss = jax.block_until_ready(loss)
    prec1 = jax.block_until_ready(prec1)

    ref_loss, ref_prec = _reference(x, label, W, b, init_w, init_b)
    assert jnp.allclose(loss, ref_loss, rtol=1e-3, atol=1e-3), (loss, ref_loss)
    assert jnp.allclose(prec1, ref_prec, rtol=1e-3, atol=1e-3), (prec1, ref_prec)

    print("KERNEL_OK")
</pallas_src>

<mosaic_0001>
module attributes {stable_mosaic.version = 11 : i64} {
  func.func @_softmaxproto_kernel(%arg0: i32, %arg1: memref<16x64xf32, #tpu.memory_space<vmem>>, %arg2: memref<8x64xf32, #tpu.memory_space<vmem>>, %arg3: memref<8x64xf32, #tpu.memory_space<vmem>>, %arg4: memref<64x512xbf16, #tpu.memory_space<vmem>>, %arg5: memref<1x512xf32, #tpu.memory_space<vmem>>, %arg6: memref<16x1xi32, #tpu.memory_space<vmem>>, %arg7: memref<2xf32, #tpu.memory_space<smem>>, %arg8: memref<1x1xf32, #tpu.memory_space<smem>>, %arg9: memref<1x1xf32, #tpu.memory_space<smem>>, %arg10: memref<16x1xf32, #tpu.memory_space<vmem>>, %arg11: memref<16x1xf32, #tpu.memory_space<vmem>>, %arg12: memref<16x1xf32, #tpu.memory_space<vmem>>) attributes {dimension_semantics = [#tpu.dimension_semantics<arbitrary>], iteration_bounds = array<i64: 2>, scalar_prefetch = 0 : i64, scratch_operands = 3 : i64, tpu.core_type = #tpu.core_type<tc>, window_params = [{pipeline_mode = #tpu.pipeline_mode<synchronous>, transform_indices = @transform_0, window_bounds = array<i64: 16, 64>}, {pipeline_mode = #tpu.pipeline_mode<synchronous>, transform_indices = @transform_1, window_bounds = array<i64: 8, 64>}, {pipeline_mode = #tpu.pipeline_mode<synchronous>, transform_indices = @transform_2, window_bounds = array<i64: 8, 64>}, {transform_indices = @transform_3, window_bounds = array<i64: 64, 512>}, {transform_indices = @transform_4, window_bounds = array<i64: 1, 512>}, {pipeline_mode = #tpu.pipeline_mode<synchronous>, transform_indices = @transform_5, window_bounds = array<i64: 16, 1>}, {transform_indices = @transform_6, window_bounds = array<i64: 2>}, {transform_indices = @transform_7, window_bounds = array<i64: 1, 1>}, {transform_indices = @transform_8, window_bounds = array<i64: 1, 1>}]} {
    %c0_i32 = arith.constant 0 : i32
    %0 = arith.cmpi eq, %arg0, %c0_i32 : i32
    %1 = arith.extui %0 : i1 to i32
    %c0_i32_0 = arith.constant 0 : i32
    %2 = arith.cmpi ne, %1, %c0_i32_0 : i32
    scf.if %2 {
      %cst_24 = arith.constant 0xFF800000 : f32
      %44 = vector.broadcast %cst_24 : f32 to vector<16x1xf32>
      %c0_25 = arith.constant 0 : index
      %c0_26 = arith.constant 0 : index
      %45 = vector.load %arg10[%c0_25, %c0_26] : memref<16x1xf32, #tpu.memory_space<vmem>>, vector<16x1xf32>
      tpu.vector_store %arg10[%c0_25, %c0_26], %44 {strides = array<i32>} : memref<16x1xf32, #tpu.memory_space<vmem>>, vector<16x1xf32>,
      %cst_27 = arith.constant 0.000000e+00 : f32
      %46 = vector.broadcast %cst_27 : f32 to vector<16x1xf32>
      %c0_28 = arith.constant 0 : index
      %c0_29 = arith.constant 0 : index
      %47 = vector.load %arg11[%c0_28, %c0_29] : memref<16x1xf32, #tpu.memory_space<vmem>>, vector<16x1xf32>
      tpu.vector_store %arg11[%c0_28, %c0_29], %46 {strides = array<i32>} : memref<16x1xf32, #tpu.memory_space<vmem>>, vector<16x1xf32>,
      %cst_30 = arith.constant 0.000000e+00 : f32
      %48 = vector.broadcast %cst_30 : f32 to vector<16x1xf32>
      %c0_31 = arith.constant 0 : index
      %c0_32 = arith.constant 0 : index
      %49 = vector.load %arg12[%c0_31, %c0_32] : memref<16x1xf32, #tpu.memory_space<vmem>>, vector<16x1xf32>
      tpu.vector_store %arg12[%c0_31, %c0_32], %48 {strides = array<i32>} : memref<16x1xf32, #tpu.memory_space<vmem>>, vector<16x1xf32>,
    } else {
    }
    %c0 = arith.constant 0 : index
    %c0_1 = arith.constant 0 : index
    %3 = vector.load %arg1[%c0, %c0_1] : memref<16x64xf32, #tpu.memory_space<vmem>>, vector<16x64xf32>
    %4 = arith.truncf %3 : vector<16x64xf32> to vector<16x64xbf16>
    %c0_2 = arith.constant 0 : index
    %c0_3 = arith.constant 0 : index
    %5 = vector.load %arg4[%c0_2, %c0_3] : memref<64x512xbf16, #tpu.memory_space<vmem>>, vector<64x512xbf16>
    %cst = arith.constant dense<0.000000e+00> : vector<16x512xf32>
    %6 = tpu.matmul %4, %5, %cst {dimension_numbers = #tpu.dot_dimension_numbers<[1], [0], [0], [1], [0, 0, 1, 1], [], []>} : vector<16x64xbf16>, vector<64x512xbf16>, vector<16x512xf32> -> vector<16x512xf32>
    %c0_4 = arith.constant 0 : index
    %c0_5 = arith.constant 0 : index
    %7 = vector.load %arg5[%c0_4, %c0_5] : memref<1x512xf32, #tpu.memory_space<vmem>>, vector<1x512xf32>
    %8 = vector.broadcast %7 : vector<1x512xf32> to vector<16x512xf32>
    %9 = arith.addf %6, %8 : vector<16x512xf32>
    %c0_6 = arith.constant 0 : index
    %c0_7 = arith.constant 0 : index
    %10 = vector.load %arg10[%c0_6, %c0_7] : memref<16x1xf32, #tpu.memory_space<vmem>>, vector<16x1xf32>
    %cst_8 = arith.constant dense<0xFF800000> : vector<16xf32>
    %11 = vector.multi_reduction <maximumf>, %9, %cst_8 [1] : vector<16x512xf32> to vector<16xf32>
    %12 = vector.shape_cast %11 : vector<16xf32> to vector<16x1xf32>
    %13 = arith.maximumf %10, %12 : vector<16x1xf32>
    %c0_9 = arith.constant 0 : index
    %c0_10 = arith.constant 0 : index
    %14 = vector.load %arg11[%c0_9, %c0_10] : memref<16x1xf32, #tpu.memory_space<vmem>>, vector<16x1xf32>
    %15 = arith.subf %10, %13 : vector<16x1xf32>
    %16 = math.exp %15 : vector<16x1xf32>
    %17 = arith.mulf %14, %16 : vector<16x1xf32>
    %18 = vector.broadcast %13 : vector<16x1xf32> to vector<16x512xf32>
    %19 = arith.subf %9, %18 : vector<16x512xf32>
    %20 = math.exp %19 : vector<16x512xf32>
    %cst_11 = arith.constant dense<0.000000e+00> : vector<16xf32>
    %21 = vector.multi_reduction <add>, %20, %cst_11 [1] : vector<16x512xf32> to vector<16xf32>
    %22 = vector.shape_cast %21 : vector<16xf32> to vector<16x1xf32>
    %23 = arith.addf %17, %22 : vector<16x1xf32>
    %c0_12 = arith.constant 0 : index
    %c0_13 = arith.constant 0 : index
    %24 = vector.load %arg11[%c0_12, %c0_13] : memref<16x1xf32, #tpu.memory_space<vmem>>, vector<16x1xf32>
    tpu.vector_store %arg11[%c0_12, %c0_13], %23 {strides = array<i32>} : memref<16x1xf32, #tpu.memory_space<vmem>>, vector<16x1xf32>,
    %25 = tpu.iota {dimensions = array<i32: 1>} : vector<16x512xi32>
    %c512_i32 = arith.constant 512 : i32
    %26 = arith.muli %arg0, %c512_i32 : i32
    %27 = vector.broadcast %26 : i32 to vector<16x512xi32>
    %28 = arith.addi %25, %27 : vector<16x512xi32>
    %c0_14 = arith.constant 0 : index
    %c0_15 = arith.constant 0 : index
    %29 = vector.load %arg6[%c0_14, %c0_15] : memref<16x1xi32, #tpu.memory_space<vmem>>, vector<16x1xi32>
    %30 = vector.broadcast %29 : vector<16x1xi32> to vector<16x512xi32>
    %31 = arith.cmpi eq, %28, %30 : vector<16x512xi32>
    %32 = arith.extui %31 : vector<16x512xi1> to vector<16x512xi32>
    %33 = arith.sitofp %32 : vector<16x512xi32> to vector<16x512xf32>
    %c0_16 = arith.constant 0 : index
    %c0_17 = arith.constant 0 : index
    %34 = vector.load %arg12[%c0_16, %c0_17] : memref<16x1xf32, #tpu.memory_space<vmem>>, vector<16x1xf32>
    %35 = arith.mulf %9, %33 : vector<16x512xf32>
    %cst_18 = arith.constant dense<0.000000e+00> : vector<16xf32>
    %36 = vector.multi_reduction <add>, %35, %cst_18 [1] : vector<16x512xf32> to vector<16xf32>
    %37 = vector.shape_cast %36 : vector<16xf32> to vector<16x1xf32>
    %38 = arith.addf %34, %37 : vector<16x1xf32>
    %c0_19 = arith.constant 0 : index
    %c0_20 = arith.constant 0 : index
    %39 = vector.load %arg12[%c0_19, %c0_20] : memref<16x1xf32, #tpu.memory_space<vmem>>, vector<16x1xf32>
    tpu.vector_store %arg12[%c0_19, %c0_20], %38 {strides = array<i32>} : memref<16x1xf32, #tpu.memory_space<vmem>>, vector<16x1xf32>,
    %c0_21 = arith.constant 0 : index
    %c0_22 = arith.constant 0 : index
    %40 = vector.load %arg10[%c0_21, %c0_22] : memref<16x1xf32, #tpu.memory_space<vmem>>, vector<16x1xf32>
    tpu.vector_store %arg10[%c0_21, %c0_22], %13 {strides = array<i32>} : memref<16x1xf32, #tpu.memory_space<vmem>>, vector<16x1xf32>,
    %c1_i32 = arith.constant 1 : i32
    %41 = arith.cmpi eq, %arg0, %c1_i32 : i32
    %42 = arith.extui %41 : i1 to i32
    %c0_i32_23 = arith.constant 0 : i32
    %43 = arith.cmpi ne, %42, %c0_i32_23 : i32
    scf.if %43 {
      %c0_24 = arith.constant 0 : index
      %c0_25 = arith.constant 0 : index
      %44 = vector.load %arg10[%c0_24, %c0_25] : memref<16x1xf32, #tpu.memory_space<vmem>>, vector<16x1xf32>
      %c0_26 = arith.constant 0 : index
      %c0_27 = arith.constant 0 : index
      %45 = vector.load %arg11[%c0_26, %c0_27] : memref<16x1xf32, #tpu.memory_space<vmem>>, vector<16x1xf32>
      %46 = math.log %45 : vector<16x1xf32>
      %47 = arith.addf %44, %46 : vector<16x1xf32>
      %c0_28 = arith.constant 0 : index
      %c0_29 = arith.constant 0 : index
      %48 = vector.load %arg12[%c0_28, %c0_29] : memref<16x1xf32, #tpu.memory_space<vmem>>, vector<16x1xf32>
      %49 = arith.subf %47, %48 : vector<16x1xf32>
      %50 = vector.shape_cast %49 : vector<16x1xf32> to vector<1x16x1xf32>
      %cst_30 = arith.constant dense<0.000000e+00> : vector<1xf32>
      %51 = vector.multi_reduction <add>, %50, %cst_30 [1, 2] : vector<1x16x1xf32> to vector<1xf32>
      %52 = vector.shape_cast %51 : vector<1xf32> to vector<1x1x1xf32>
      %53 = vector.extract %52[0, 0, 0] : f32 from vector<1x1x1xf32>
      %cst_31 = arith.constant 6.250000e-02 : f32
      %54 = arith.mulf %53, %cst_31 : f32
      %c0_32 = arith.constant 0 : index
      %c0_33 = arith.constant 0 : index
      %55 = vector.load %arg12[%c0_32, %c0_33] : memref<16x1xf32, #tpu.memory_space<vmem>>, vector<16x1xf32>
      %c0_34 = arith.constant 0 : index
      %c0_35 = arith.constant 0 : index
      %56 = vector.load %arg10[%c0_34, %c0_35] : memref<16x1xf32, #tpu.memory_space<vmem>>, vector<16x1xf32>
      %57 = arith.cmpf oge, %55, %56 : vector<16x1xf32>
      %58 = arith.extui %57 : vector<16x1xi1> to vector<16x1xi32>
      %59 = arith.sitofp %58 : vector<16x1xi32> to vector<16x1xf32>
      %60 = vector.shape_cast %59 : vector<16x1xf32> to vector<1x16x1xf32>
      %cst_36 = arith.constant dense<0.000000e+00> : vector<1xf32>
      %61 = vector.multi_reduction <add>, %60, %cst_36 [1, 2] : vector<1x16x1xf32> to vector<1xf32>
      %62 = vector.shape_cast %61 : vector<1xf32> to vector<1x1x1xf32>
      %63 = vector.extract %62[0, 0, 0] : f32 from vector<1x1x1xf32>
      %cst_37 = arith.constant 6.250000e+00 : f32
      %64 = arith.mulf %63, %cst_37 : f32
      %c0_38 = arith.constant 0 : index
      %c0_39 = arith.constant 0 : index
      %65 = vector.load %arg2[%c0_38, %c0_39] : memref<8x64xf32, #tpu.memory_space<vmem>>, vector<8x64xf32>
      %c0_40 = arith.constant 0 : index
      %c0_41 = arith.constant 0 : index
      %66 = vector.load %arg3[%c0_40, %c0_41] : memref<8x64xf32, #tpu.memory_space<vmem>>, vector<8x64xf32>
      %67 = arith.mulf %65, %65 : vector<8x64xf32>
      %cst_42 = arith.constant dense<0.000000e+00> : vector<8xf32>
      %68 = vector.multi_reduction <add>, %67, %cst_42 [1] : vector<8x64xf32> to vector<8xf32>
      %69 = vector.shape_cast %68 : vector<8xf32> to vector<8x1xf32>
      %cst_43 = arith.constant 1.000000e-16 : f32
      %70 = vector.broadcast %cst_43 : f32 to vector<8x1xf32>
      %71 = arith.maximumf %69, %70 : vector<8x1xf32>
      %72 = math.rsqrt %71 : vector<8x1xf32>
      %73 = arith.mulf %66, %66 : vector<8x64xf32>
      %cst_44 = arith.constant dense<0.000000e+00> : vector<8xf32>
      %74 = vector.multi_reduction <add>, %73, %cst_44 [1] : vector<8x64xf32> to vector<8xf32>
      %75 = vector.shape_cast %74 : vector<8xf32> to vector<8x1xf32>
      %cst_45 = arith.constant 1.000000e-16 : f32
      %76 = vector.broadcast %cst_45 : f32 to vector<8x1xf32>
      %77 = arith.maximumf %75, %76 : vector<8x1xf32>
      %78 = math.rsqrt %77 : vector<8x1xf32>
      %79 = vector.broadcast %72 : vector<8x1xf32> to vector<8x64xf32>
      %80 = arith.mulf %65, %79 : vector<8x64xf32>
      %81 = vector.broadcast %78 : vector<8x1xf32> to vector<8x64xf32>
      %82 = arith.mulf %66, %81 : vector<8x64xf32>
      %c0_46 = arith.constant 0 : index
      %83 = memref.load %arg7[%c0_46] : memref<2xf32, #tpu.memory_space<smem>>
      %cst_47 = arith.constant 9.99999997E-7 : f32
      %84 = arith.maximumf %83, %cst_47 : f32
      %c1 = arith.constant 1 : index
      %85 = memref.load %arg7[%c1] : memref<2xf32, #tpu.memory_space<smem>>
      %cst_48 = arith.constant dense<0.000000e+00> : vector<8x8xf32>
      %86 = tpu.matmul %80, %82, %cst_48 {dimension_numbers = #tpu.dot_dimension_numbers<[1], [1], [0], [0], [0, 0, 1, 0], [], []>} : vector<8x64xf32>, vector<8x64xf32>, vector<8x8xf32> -> vector<8x8xf32>
      %87 = vector.broadcast %84 : f32 to vector<8x8xf32>
      %88 = arith.mulf %86, %87 : vector<8x8xf32>
      %89 = vector.broadcast %85 : f32 to vector<8x8xf32>
      %90 = arith.addf %88, %89 : vector<8x8xf32>
      %91 = arith.mulf %80, %82 : vector<8x64xf32>
      %cst_49 = arith.constant dense<0.000000e+00> : vector<8xf32>
      %92 = vector.multi_reduction <add>, %91, %cst_49 [1] : vector<8x64xf32> to vector<8xf32>
      %93 = vector.shape_cast %92 : vector<8xf32> to vector<8x1xf32>
      %94 = vector.broadcast %84 : f32 to vector<8x1xf32>
      %95 = arith.mulf %93, %94 : vector<8x1xf32>
      %96 = vector.broadcast %85 : f32 to vector<8x1xf32>
      %97 = arith.addf %95, %96 : vector<8x1xf32>
      %cst_50 = arith.constant dense<0xFF800000> : vector<8xf32>
      %98 = vector.multi_reduction <maximumf>, %90, %cst_50 [1] : vector<8x8xf32> to vector<8xf32>
      %99 = vector.shape_cast %98 : vector<8xf32> to vector<8x1xf32>
      %100 = vector.broadcast %99 : vector<8x1xf32> to vector<8x8xf32>
      %101 = arith.subf %90, %100 : vector<8x8xf32>
      %102 = math.exp %101 : vector<8x8xf32>
      %cst_51 = arith.constant dense<0.000000e+00> : vector<8xf32>
      %103 = vector.multi_reduction <add>, %102, %cst_51 [1] : vector<8x8xf32> to vector<8xf32>
      %104 = vector.shape_cast %103 : vector<8xf32> to vector<8x1xf32>
      %105 = math.log %104 : vector<8x1xf32>
      %106 = arith.addf %99, %105 : vector<8x1xf32>
      %107 = arith.subf %106, %97 : vector<8x1xf32>
      %108 = vector.shape_cast %107 : vector<8x1xf32> to vector<1x8x1xf32>
      %cst_52 = arith.constant dense<0.000000e+00> : vector<1xf32>
      %109 = vector.multi_reduction <add>, %108, %cst_52 [1, 2] : vector<1x8x1xf32> to vector<1xf32>
      %110 = vector.shape_cast %109 : vector<1xf32> to vector<1x1x1xf32>
      %111 = vector.extract %110[0, 0, 0] : f32 from vector<1x1x1xf32>
      %cst_53 = arith.constant 1.250000e-01 : f32
      %112 = arith.mulf %111, %cst_53 : f32
      %113 = arith.addf %54, %112 : f32
      %c0_54 = arith.constant 0 : index
      %c0_55 = arith.constant 0 : index
      %114 = memref.load %arg8[%c0_54, %c0_55] : memref<1x1xf32, #tpu.memory_space<smem>>
      memref.store %113, %arg8[%c0_54, %c0_55] : memref<1x1xf32, #tpu.memory_space<smem>>
      %c0_56 = arith.constant 0 : index
      %c0_57 = arith.constant 0 : index
      %115 = memref.load %arg9[%c0_56, %c0_57] : memref<1x1xf32, #tpu.memory_space<smem>>
      memref.store %64, %arg9[%c0_56, %c0_57] : memref<1x1xf32, #tpu.memory_space<smem>>
    } else {
    }
    return
  }
  func.func @transform_0(%arg0: i32) -> (i32, i32) {
    %c0_i32 = arith.constant 0 : i32
    %c0_i32_0 = arith.constant 0 : i32
    %c0_i32_1 = arith.constant 0 : i32
    return %c0_i32, %c0_i32_0 : i32, i32
  }
  func.func @transform_1(%arg0: i32) -> (i32, i32) {
    %c0_i32 = arith.constant 0 : i32
    %c0_i32_0 = arith.constant 0 : i32
    %c0_i32_1 = arith.constant 0 : i32
    return %c0_i32, %c0_i32_0 : i32, i32
  }
  func.func @transform_2(%arg0: i32) -> (i32, i32) {
    %c0_i32 = arith.constant 0 : i32
    %c0_i32_0 = arith.constant 0 : i32
    %c0_i32_1 = arith.constant 0 : i32
    return %c0_i32, %c0_i32_0 : i32, i32
  }
  func.func @transform_3(%arg0: i32) -> (i32, i32) {
    %c0_i32 = arith.constant 0 : i32
    %c0_i32_0 = arith.constant 0 : i32
    return %c0_i32, %arg0 : i32, i32
  }
  func.func @transform_4(%arg0: i32) -> (i32, i32) {
    %c0_i32 = arith.constant 0 : i32
    %c0_i32_0 = arith.constant 0 : i32
    return %c0_i32, %arg0 : i32, i32
  }
  func.func @transform_5(%arg0: i32) -> (i32, i32) {
    %c0_i32 = arith.constant 0 : i32
    %c0_i32_0 = arith.constant 0 : i32
    %c0_i32_1 = arith.constant 0 : i32
    return %c0_i32, %c0_i32_0 : i32, i32
  }
  func.func @transform_6(%arg0: i32) -> i32 {
    %c0_i32 = arith.constant 0 : i32
    %c0_i32_0 = arith.constant 0 : i32
    return %c0_i32 : i32
  }
  func.func @transform_7(%arg0: i32) -> (i32, i32) {
    %c0_i32 = arith.constant 0 : i32
    %c0_i32_0 = arith.constant 0 : i32
    %c0_i32_1 = arith.constant 0 : i32
    return %c0_i32, %c0_i32_0 : i32, i32
  }
  func.func @transform_8(%arg0: i32) -> (i32, i32) {
    %c0_i32 = arith.constant 0 : i32
    %c0_i32_0 = arith.constant 0 : i32
    %c0_i32_1 = arith.constant 0 : i32
    return %c0_i32, %c0_i32_0 : i32, i32
  }
}

</mosaic_0001>

<llo_original>
// kernel: tpu_custom_call.1
$region0: #{tpu_custom_call.1}
  #allocation0 [shape = 'u32[]', space=smem, size = 0x4, offset = 0x4, fixed_abs, tag = 'smem constant byte address 0x4 - core index']
  #allocation1 [shape = 'u32[144,128]{1,0:T(1,128)}', space=vmem, size = 0x12000, scoped, tag = 'internal scratch']
  #allocation2 [shape = 'f32[16,1]{1,0:T(8,128)}', space=vmem, size = 0x2000, scoped, tag = 'scratch operand']
  #allocation3 [shape = 'f32[16,1]{1,0:T(8,128)}', space=vmem, size = 0x2000, scoped, tag = 'scratch operand']
  #allocation4 [shape = 'f32[16,1]{1,0:T(8,128)}', space=vmem, size = 0x2000, scoped, tag = 'scratch operand']
  %s0 = inlined_call_operand.vmem [shape: f32[16,64], index: 0, kind: input, shape index: {}]
  %s1 = inlined_call_operand.hbm [shape: f32[8,64], index: 1, kind: input, shape index: {}]
  %s2 = inlined_call_operand.hbm [shape: f32[8,64], index: 2, kind: input, shape index: {}]
  %s3 = inlined_call_operand.hbm [shape: bf16[64,1024], index: 3, kind: input, shape index: {}]
  %s4 = inlined_call_operand.vmem [shape: f32[1,1024], index: 4, kind: input, shape index: {}]
  %s5 = inlined_call_operand.vmem [shape: s32[16,1], index: 5, kind: input, shape index: {}]
  %s6 = inlined_call_operand.vmem [shape: f32[2], index: 6, kind: input, shape index: {}]
  %s7 = inlined_call_operand.hbm [shape: f32[1,1], index: 7, kind: output, shape index: {0}]
  %s8 = inlined_call_operand.hbm [shape: f32[1,1], index: 8, kind: output, shape index: {1}]
  %9 = xla_tuple %s7, %s8
  %s10 = sld [smem:[#allocation0]]
  $region93: #{tpu_custom_call.1} parent=0
    _
  %s12 = ssub.s32 1, %s10
  %s13 = scalar_select 0, %s12, %s10
  $region1: #{tpu_custom_call.1} parent=0
    #allocation5 [shape = 'u8[4096]{0}', space=vmem, size = 0x1000, scoped, tag = 'input window, operand 1, single buffered']
    #allocation6 [shape = 's32[2]{0}', space=sflag, size = 0x8, scoped, tag = 'scoped memory for tpu_custom_call.1']
    #allocation7 [shape = 's32[2]{0}', space=sflag, size = 0x8, scoped, tag = 'scoped memory for tpu_custom_call.1']
    #allocation8 [shape = 's32[2]{0}', space=sflag, size = 0x8, scoped, tag = 'scoped memory for tpu_custom_call.1']
    #allocation9 [shape = 'u8[4096]{0}', space=vmem, size = 0x1000, scoped, tag = 'input window, operand 2, single buffered']
    #allocation10 [shape = 's32[1]{0}', space=sflag, size = 0x4, scoped, tag = 'scoped memory for tpu_custom_call.1']
    #allocation11 [shape = 'u8[131072]{0}', space=vmem, size = 0x20000, scoped, tag = 'input window, operand 3']
    #allocation12 [shape = 'u8[512]{0}', space=smem, size = 0x200, scoped, tag = 'input window, operand 6, single buffered']
    #allocation13 [shape = 'u8[512]{0}', space=smem, size = 0x200, scoped, tag = 'output window, operand 0, single buffered']
    #allocation14 [shape = 'u8[512]{0}', space=smem, size = 0x200, scoped, tag = 'output window, operand 1, single buffered']
    #allocation15 [shape = 's32[1]{0}', space=sflag, size = 0x4, scoped, tag = 'scoped memory for tpu_custom_call.1']
    %14 = vsyncpa [#allocation6], 0
    %15 = vsyncpa [#allocation10], 0
    %16 = vsyncpa [#allocation8], 0
    %17 = vsyncpa [#allocation7], 0
    %18 = vsyncpa [#allocation15], 0
    loop: start=0, step=1, limit=4
    $region2: #{tpu_custom_call.1} parent=1 // loop_pre_header
      _
    $region3: #{tpu_custom_call.1} parent=1 // loop_header
      %s20 = sphi 0, %s24
      %p21 = scmp.ge.s32.totalorder %s20, 4
      %s28 = sphi 0, %s28
      %s30 = sphi 0, %s28
      %s31 = sphi 0, %s30
      %s45 = sphi 0, %s31
      %s49 = sphi 0, %s49
      %s51 = sphi 0, %s49
      %s52 = sphi 0, %s51
      %s66 = sphi 0, %s52
      %s70 = sphi 0, %s70
      %s72 = sphi 0, %s70
      %s73 = sphi 0, %s72
      %s87 = sphi 0, %s73
      %s93 = sphi 0, %s95
      %s96 = sphi 0, %s93
      %s97 = sphi 0, %s96
      %s113 = sphi 0, %s97
      %s119 = sphi 0, %s121
      %s122 = sphi 0, %s119
      %s123 = sphi 0, %s122
      %s139 = sphi 0, %s123
      %s143 = sphi 0, %s143
      %s145 = sphi 0, %s143
      %s146 = sphi 0, %s145
      %s160 = sphi 0, %s146
      %s164 = sphi 0, %s164
      %s166 = sphi 0, %s164
      %s167 = sphi 0, %s166
      %s181 = sphi 0, %s167
      %s185 = sphi 0, %s185
      %s187 = sphi 0, %s185
      %s188 = sphi 0, %s187
      %s202 = sphi 0, %s188
      %s206 = sphi 0, %s206
      %s208 = sphi 0, %s206
      %s209 = sphi 0, %s208
      %s223 = sphi 0, %s209
    $region4: #{tpu_custom_call.1} parent=1 // loop_header_branch
      %23 = sbr.rel (%p21) target = $region8
    $region5: #{tpu_custom_call.1} parent=1 // loop_body
      %s25 = ssub.s32 %s20, 1
      %s26 = ssub.s32 %s20, 2
      %s27 = sadd.s32 %s20, 1
      %s29 = sadd.s32 %s28, 1
      %p32 = scmp.eq.s32.totalorder %s20, 1
      %p33 = scmp.ne.s32.totalorder %s28, %s30
      %p34 = scmp.eq.s32.totalorder %s20, 0
      %p35 = por %p33, %p34
      %p36 = scmp.ne.s32.totalorder %s28, %s30
      %p37 = scmp.eq.s32.totalorder %s25, 1
      %p38 = por %p36, %p37
      %p39 = scmp.ne.s32.totalorder %s30, %s31
      %p40 = scmp.eq.s32.totalorder %s25, 0
      %p41 = por %p39, %p40
      %p42 = scmp.ne.s32.totalorder %s30, %s31
      %p43 = scmp.eq.s32.totalorder %s26, 1
      %p44 = por %p42, %p43
      %p46 = scmp.ne.s32.totalorder %s31, %s45
      %p47 = scmp.eq.s32.totalorder %s26, 0
      %p48 = por %p46, %p47
      %s50 = sadd.s32 %s49, 1
      %p53 = scmp.eq.s32.totalorder %s20, 1
      %p54 = scmp.ne.s32.totalorder %s49, %s51
      %p55 = scmp.eq.s32.totalorder %s20, 0
      %p56 = por %p54, %p55
      %p57 = scmp.ne.s32.totalorder %s49, %s51
      %p58 = scmp.eq.s32.totalorder %s25, 1
      %p59 = por %p57, %p58
      %p60 = scmp.ne.s32.totalorder %s51, %s52
      %p61 = scmp.eq.s32.totalorder %s25, 0
      %p62 = por %p60, %p61
      %p63 = scmp.ne.s32.totalorder %s51, %s52
      %p64 = scmp.eq.s32.totalorder %s26, 1
      %p65 = por %p63, %p64
      %p67 = scmp.ne.s32.totalorder %s52, %s66
      %p68 = scmp.eq.s32.totalorder %s26, 0
      %p69 = por %p67, %p68
      %s71 = sadd.s32 %s70, 1
      %p74 = scmp.eq.s32.totalorder %s20, 1
      %p75 = scmp.ne.s32.totalorder %s70, %s72
      %p76 = scmp.eq.s32.totalorder %s20, 0
      %p77 = por %p75, %p76
      %p78 = scmp.ne.s32.totalorder %s70, %s72
      %p79 = scmp.eq.s32.totalorder %s25, 1
      %p80 = por %p78, %p79
      %p81 = scmp.ne.s32.totalorder %s72, %s73
      %p82 = scmp.eq.s32.totalorder %s25, 0
      %p83 = por %p81, %p82
      %p84 = scmp.ne.s32.totalorder %s72, %s73
      %p85 = scmp.eq.s32.totalorder %s26, 1
      %p86 = por %p84, %p85
      %p88 = scmp.ne.s32.totalorder %s73, %s87
      %p89 = scmp.eq.s32.totalorder %s26, 0
      %p90 = por %p88, %p89
      %s91 = ssub.s32 %s20, %s27
      %p92 = scmp.eq.s32.totalorder %s91, 0
      %s94 = sadd.s32 %s93, 1
      %s95 = scalar_select %p92, %s93, %s94
      %p98 = pneg %p92
      %p99 = scmp.eq.s32.totalorder %s20, 1
      %p100 = por %p98, %p99
      %p101 = scmp.ne.s32.totalorder %s93, %s96
      %p102 = scmp.eq.s32.totalorder %s20, 0
      %p103 = por %p101, %p102
      %p104 = scmp.ne.s32.totalorder %s93, %s96
      %p105 = scmp.eq.s32.totalorder %s25, 1
      %p106 = por %p104, %p105
      %p107 = scmp.ne.s32.totalorder %s96, %s97
      %p108 = scmp.eq.s32.totalorder %s25, 0
      %p109 = por %p107, %p108
      %p110 = scmp.ne.s32.totalorder %s96, %s97
      %p111 = scmp.eq.s32.totalorder %s26, 1
      %p112 = por %p110, %p111
      %p114 = scmp.ne.s32.totalorder %s97, %s113
      %p115 = scmp.eq.s32.totalorder %s26, 0
      %p116 = por %p114, %p115
      %s117 = ssub.s32 %s20, %s27
      %p118 = scmp.eq.s32.totalorder %s117, 0
      %s120 = sadd.s32 %s119, 1
      %s121 = scalar_select %p118, %s119, %s120
      %p124 = pneg %p118
      %p125 = scmp.eq.s32.totalorder %s20, 1
      %p126 = por %p124, %p125
      %p127 = scmp.ne.s32.totalorder %s119, %s122
      %p128 = scmp.eq.s32.totalorder %s20, 0
      %p129 = por %p127, %p128
      %p130 = scmp.ne.s32.totalorder %s119, %s122
      %p131 = scmp.eq.s32.totalorder %s25, 1
      %p132 = por %p130, %p131
      %p133 = scmp.ne.s32.totalorder %s122, %s123
      %p134 = scmp.eq.s32.totalorder %s25, 0
      %p135 = por %p133, %p134
      %p136 = scmp.ne.s32.totalorder %s122, %s123
      %p137 = scmp.eq.s32.totalorder %s26, 1
      %p138 = por %p136, %p137
      %p140 = scmp.ne.s32.totalorder %s123, %s139
      %p141 = scmp.eq.s32.totalorder %s26, 0
      %p142 = por %p140, %p141
      %s144 = sadd.s32 %s143, 1
      %p147 = scmp.eq.s32.totalorder %s20, 1
      %p148 = scmp.ne.s32.totalorder %s143, %s145
      %p149 = scmp.eq.s32.totalorder %s20, 0
      %p150 = por %p148, %p149
      %p151 = scmp.ne.s32.totalorder %s143, %s145
      %p152 = scmp.eq.s32.totalorder %s25, 1
      %p153 = por %p151, %p152
      %p154 = scmp.ne.s32.totalorder %s145, %s146
      %p155 = scmp.eq.s32.totalorder %s25, 0
      %p156 = por %p154, %p155
      %p157 = scmp.ne.s32.totalorder %s145, %s146
      %p158 = scmp.eq.s32.totalorder %s26, 1
      %p159 = por %p157, %p158
      %p161 = scmp.ne.s32.totalorder %s146, %s160
      %p162 = scmp.eq.s32.totalorder %s26, 0
      %p163 = por %p161, %p162
      %s165 = sadd.s32 %s164, 1
      %p168 = scmp.eq.s32.totalorder %s20, 1
      %p169 = scmp.ne.s32.totalorder %s164, %s166
      %p170 = scmp.eq.s32.totalorder %s20, 0
      %p171 = por %p169, %p170
      %p172 = scmp.ne.s32.totalorder %s164, %s166
      %p173 = scmp.eq.s32.totalorder %s25, 1
      %p174 = por %p172, %p173
      %p175 = scmp.ne.s32.totalorder %s166, %s167
      %p176 = scmp.eq.s32.totalorder %s25, 0
      %p177 = por %p175, %p176
      %p178 = scmp.ne.s32.totalorder %s166, %s167
      %p179 = scmp.eq.s32.totalorder %s26, 1
      %p180 = por %p178, %p179
      %p182 = scmp.ne.s32.totalorder %s167, %s181
      %p183 = scmp.eq.s32.totalorder %s26, 0
      %p184 = por %p182, %p183
      %s186 = sadd.s32 %s185, 1
      %p189 = scmp.eq.s32.totalorder %s20, 1
      %p190 = scmp.ne.s32.totalorder %s185, %s187
      %p191 = scmp.eq.s32.totalorder %s20, 0
      %p192 = por %p190, %p191
      %p193 = scmp.ne.s32.totalorder %s185, %s187
      %p194 = scmp.eq.s32.totalorder %s25, 1
      %p195 = por %p193, %p194
      %p196 = scmp.ne.s32.totalorder %s187, %s188
      %p197 = scmp.eq.s32.totalorder %s25, 0
      %p198 = por %p196, %p197
      %p199 = scmp.ne.s32.totalorder %s187, %s188
      %p200 = scmp.eq.s32.totalorder %s26, 1
      %p201 = por %p199, %p200
      %p203 = scmp.ne.s32.totalorder %s188, %s202
      %p204 = scmp.eq.s32.totalorder %s26, 0
      %p205 = por %p203, %p204
      %s207 = sadd.s32 %s206, 1
      %p210 = scmp.eq.s32.totalorder %s20, 1
      %p211 = scmp.ne.s32.totalorder %s206, %s208
      %p212 = scmp.eq.s32.totalorder %s20, 0
      %p213 = por %p211, %p212
      %p214 = scmp.ne.s32.totalorder %s206, %s208
      %p215 = scmp.eq.s32.totalorder %s25, 1
      %p216 = por %p214, %p215
      %p217 = scmp.ne.s32.totalorder %s208, %s209
      %p218 = scmp.eq.s32.totalorder %s25, 0
      %p219 = por %p217, %p218
      %p220 = scmp.ne.s32.totalorder %s208, %s209
      %p221 = scmp.eq.s32.totalorder %s26, 1
      %p222 = por %p220, %p221
      %p224 = scmp.ne.s32.totalorder %s209, %s223
      %p225 = scmp.eq.s32.totalorder %s26, 0
      %p226 = por %p224, %p225
      %p227 = scmp.le.s32.totalorder 1, %s20
      %p228 = scmp.lt.s32.totalorder %s20, 3
      %p229 = pnand %p227, %p228
      %p230 = pneg %p229
      // Predicated region
      $region9: #{tpu_custom_call.1} parent=5 // pred_check
        _
      $region10: #{tpu_custom_call.1} parent=5 // pred_check_branch
        %232 = sbr.rel (%p229) target = $region12
      $region11: #{tpu_custom_call.1} parent=5 // pred_region
        %s233 = ssub.s32 %s20, 1
        // Predicated region
        $region13: #{tpu_custom_call.1} parent=11 // pred_check
          %p234 = pneg %p41
        $region14: #{tpu_custom_call.1} parent=11 // pred_check_branch
          %236 = sbr.rel (%p234) target = $region16
        $region15: #{tpu_custom_call.1} parent=11 // pred_region
          _
        $region16: #{tpu_custom_call.1} parent=11 // pred_fallthru
          _
        // Predicated region
        $region17: #{tpu_custom_call.1} parent=11 // pred_check
          %p237 = pneg %p62
        $region18: #{tpu_custom_call.1} parent=11 // pred_check_branch
          %239 = sbr.rel (%p237) target = $region20
        $region19: #{tpu_custom_call.1} parent=11 // pred_region
          %s241 = ssub.s32 128, 128
          %242 = vsyncadd [#allocation6], %s241
          %s244 = sshll.u32 [#allocation5], 4
          %s245 = int_to_ptr.vmem [resolvable:$true] %s244
          %247 = dma.hbm_to_vmem [thread:$0]  %s1, 128, %s245, [#allocation6]
        $region20: #{tpu_custom_call.1} parent=11 // pred_fallthru
          _
        // Predicated region
        $region21: #{tpu_custom_call.1} parent=11 // pred_check
          %p248 = pneg %p83
        $region22: #{tpu_custom_call.1} parent=11 // pred_check_branch
          %250 = sbr.rel (%p248) target = $region24
        $region23: #{tpu_custom_call.1} parent=11 // pred_region
          %s252 = ssub.s32 128, 128
          %253 = vsyncadd [#allocation10], %s252
          %s255 = sshll.u32 [#allocation9], 4
          %s256 = int_to_ptr.vmem [resolvable:$true] %s255
          %258 = dma.hbm_to_vmem [thread:$0]  %s2, 128, %s256, [#allocation10]
        $region24: #{tpu_custom_call.1} parent=11 // pred_fallthru
          _
        // Predicated region
        $region25: #{tpu_custom_call.1} parent=11 // pred_check
          %p259 = pneg %p156
        $region26: #{tpu_custom_call.1} parent=11 // pred_check_branch
          %261 = sbr.rel (%p259) target = $region28
        $region27: #{tpu_custom_call.1} parent=11 // pred_region
          _
        $region28: #{tpu_custom_call.1} parent=11 // pred_fallthru
          _
        // Predicated region
        $region29: #{tpu_custom_call.1} parent=11 // pred_check
          %p262 = pneg %p177
        $region30: #{tpu_custom_call.1} parent=11 // pred_check_branch
          %264 = sbr.rel (%p262) target = $region32
        $region31: #{tpu_custom_call.1} parent=11 // pred_region
          %s266 = ssub.s32 16, 16
          %267 = vsyncadd [#allocation8], %s266
          %s269 = sshll.u32 %s6, 4
          %s270 = int_to_ptr.vmem [resolvable:$true] %s269
          %272 = dma.vmem_to_smem %s270, 16, [#allocation12], [#allocation8]
        $region32: #{tpu_custom_call.1} parent=11 // pred_fallthru
          _
      $region12: #{tpu_custom_call.1} parent=5 // pred_fallthru
        _
      %p273 = scmp.lt.s32.totalorder %s20, 2
      // Predicated region
      $region33: #{tpu_custom_call.1} parent=5 // pred_check
        %p274 = pneg %p273
      $region34: #{tpu_custom_call.1} parent=5 // pred_check_branch
        %276 = sbr.rel (%p274) target = $region36
      $region35: #{tpu_custom_call.1} parent=5 // pred_region
        // Predicated region
        $region37: #{tpu_custom_call.1} parent=35 // pred_check
          %p277 = pneg %p103
        $region38: #{tpu_custom_call.1} parent=35 // pred_check_branch
          %279 = sbr.rel (%p277) target = $region40
        $region39: #{tpu_custom_call.1} parent=35 // pred_region
          %s280 = sand.u32 %s20, 1
          %s281 = scalar_lea.sflag [#allocation6], %s280
          %s282 = sand.u32 %s93, 1
          %s283 = smul.addr %s282, 128
          %s284 = scalar_lea.vmem [#allocation11], %s283
          %s285 = smul.u32 4, %s20
          %s287 = ssub.s32 2048, 2048
          %288 = vsyncadd %s281, %s287
          %s289 = smul.addr %s285, 64
          %s290 = scalar_lea.hbm %s3, %s289
          %s291 = sshll.u32 %s284, 4
          %s292 = int_to_ptr.vmem [resolvable:$true] %s291
          %297 = dma.hbm_to_vmem [thread:$0]  %s290, 2048, %s292, %s281, 512, 256, 16
        $region40: #{tpu_custom_call.1} parent=35 // pred_fallthru
          _
        // Predicated region
        $region41: #{tpu_custom_call.1} parent=35 // pred_check
          %p298 = pneg %p129
        $region42: #{tpu_custom_call.1} parent=35 // pred_check_branch
          %300 = sbr.rel (%p298) target = $region44
        $region43: #{tpu_custom_call.1} parent=35 // pred_region
          %s301 = smul.u32 4, %s20
          %p302 = scmp.lt.s32.totalorder %s301, 7
          %s303 = scalar_select %p302, %s301, 7
          %s304 = scalar_lea.vmem %s4, %s303
          %s305 = smul.u32 4, %s20
        $region44: #{tpu_custom_call.1} parent=35 // pred_fallthru
          _
      $region36: #{tpu_custom_call.1} parent=5 // pred_fallthru
        _
      %p306 = scmp.le.s32.totalorder 1, %s20
      %p307 = scmp.lt.s32.totalorder %s20, 3
      %p308 = pnand %p306, %p307
      %p309 = pneg %p308
      // Predicated region
      $region45: #{tpu_custom_call.1} parent=5 // pred_check
        _
      $region46: #{tpu_custom_call.1} parent=5 // pred_check_branch
        %311 = sbr.rel (%p308) target = $region48
      $region47: #{tpu_custom_call.1} parent=5 // pred_region
        %s312 = ssub.s32 %s20, 1
        // Predicated region
        $region49: #{tpu_custom_call.1} parent=47 // pred_check
          %p313 = pneg %p62
        $region50: #{tpu_custom_call.1} parent=47 // pred_check_branch
          %315 = sbr.rel (%p313) target = $region52
        $region51: #{tpu_custom_call.1} parent=47 // pred_region
          %316 = dma.done [#allocation6], 128
        $region52: #{tpu_custom_call.1} parent=47 // pred_fallthru
          _
        // Predicated region
        $region53: #{tpu_custom_call.1} parent=47 // pred_check
          %p317 = pneg %p83
        $region54: #{tpu_custom_call.1} parent=47 // pred_check_branch
          %319 = sbr.rel (%p317) target = $region56
        $region55: #{tpu_custom_call.1} parent=47 // pred_region
          %320 = dma.done [#allocation10], 128
        $region56: #{tpu_custom_call.1} parent=47 // pred_fallthru
          _
        %s321 = sand.u32 %s25, 1
        %s322 = scalar_lea.sflag [#allocation6], %s321
        %s323 = sand.u32 %s96, 1
        %s324 = smul.addr %s323, 128
        %s325 = scalar_lea.vmem [#allocation11], %s324
        // Predicated region
        $region57: #{tpu_custom_call.1} parent=47 // pred_check
          %p326 = pneg %p109
        $region58: #{tpu_custom_call.1} parent=47 // pred_check_branch
          %328 = sbr.rel (%p326) target = $region60
        $region59: #{tpu_custom_call.1} parent=47 // pred_region
          %329 = dma.done %s322, 2048
        $region60: #{tpu_custom_call.1} parent=47 // pred_fallthru
          _
        // Predicated region
        $region61: #{tpu_custom_call.1} parent=47 // pred_check
          %p330 = pneg %p177
        $region62: #{tpu_custom_call.1} parent=47 // pred_check_branch
          %332 = sbr.rel (%p330) target = $region64
        $region63: #{tpu_custom_call.1} parent=47 // pred_region
          %333 = dma.done [#allocation8], 16
        $region64: #{tpu_custom_call.1} parent=47 // pred_fallthru
          _
        %334 = sfence
        %p335 = pneg %p41
        %p336 = pneg %p38
        %p337 = pneg %p62
        %p338 = pneg %p59
        %p339 = pneg %p83
        %p340 = pneg %p80
        %s341 = sand.u32 %s25, 1
        %s342 = scalar_lea.sflag [#allocation6], %s341
        %s343 = sand.u32 %s96, 1
        %s344 = smul.addr %s343, 128
        %s345 = scalar_lea.vmem [#allocation11], %s344
        %p346 = pneg %p109
        %p347 = pneg %p106
        %s348 = smul.u32 4, %s25
        %p349 = scmp.lt.s32.totalorder %s348, 7
        %s350 = scalar_select %p349, %s348, 7
        %s351 = scalar_lea.vmem %s4, %s350
        %p352 = pneg %p135
        %p353 = pneg %p132
        %p354 = pneg %p156
        %p355 = pneg %p153
        %p356 = pneg %p177
        %p357 = pneg %p174
        %p358 = pneg %p198
        %p359 = pneg %p195
        %p360 = pneg %p219
        %p361 = pneg %p216
        %s362 = smul.u32 4, %s25
        %s363 = smul.u32 4, %s25
        %p364 = scmp.lt.s32.totalorder %s363, 7
        %s365 = scalar_select %p364, %s363, 7
        %s366 = scalar_lea.vmem %s4, %s365
        %s367 = smul.u32 4, %s25
        %p369 = scmp.eq.s32.totalorder %s25, 0
        // Predicated region
        $region65: #{tpu_custom_call.1} parent=47 // pred_check
          %p370 = pneg %p369
        $region66: #{tpu_custom_call.1} parent=47 // pred_check_branch
          %372 = sbr.rel (%p370) target = $region68
        $region67: #{tpu_custom_call.1} parent=47 // pred_region
          %vm373 = vcmask 7168
          %374 = vst.msk [vmem:[#allocation2] sm:$0xff] %vm373, -inf
          %375 = vst.msk [vmem:[#allocation2 + $0x8] sm:$0xff] %vm373, -inf
          %376 = vst.msk [vmem:[#allocation3] sm:$0xff] %vm373, 0.0
          %377 = vst.msk [vmem:[#allocation3 + $0x8] sm:$0xff] %vm373, 0.0
          %378 = vst.msk [vmem:[#allocation4] sm:$0xff] %vm373, 0.0
          %379 = vst.msk [vmem:[#allocation4 + $0x8] sm:$0xff] %vm373, 0.0
        $region68: #{tpu_custom_call.1} parent=47 // pred_fallthru
          _
        %v380 = vld [vmem:[%s0] sm:$0xff]
        %v381 = vld [vmem:[%s0 + $0x8] sm:$0xff]
        %v382 = vpack.c.bf16 %v381, %v380
        %v383 = vld [vmem:[%s325] sm:$0xff]
        %v384 = vld [vmem:[%s325 + $0x8] sm:$0xff]
        %v385 = vld [vmem:[%s325 + $0x10] sm:$0xff]
        %v386 = vld [vmem:[%s325 + $0x18] sm:$0xff]
        %v387 = vld [vmem:[%s325 + $0x20] sm:$0xff]
        %v388 = vld [vmem:[%s325 + $0x28] sm:$0xff]
        %v389 = vld [vmem:[%s325 + $0x30] sm:$0xff]
        %v390 = vld [vmem:[%s325 + $0x38] sm:$0xff]
        %v391 = vld [vmem:[%s325 + $0x40] sm:$0xff]
        %v392 = vld [vmem:[%s325 + $0x48] sm:$0xff]
        %v393 = vld [vmem:[%s325 + $0x50] sm:$0xff]
        %v394 = vld [vmem:[%s325 + $0x58] sm:$0xff]
        %v395 = vld [vmem:[%s325 + $0x60] sm:$0xff]
        %v396 = vld [vmem:[%s325 + $0x68] sm:$0xff]
        %v397 = vld [vmem:[%s325 + $0x70] sm:$0xff]
        %v398 = vld [vmem:[%s325 + $0x78] sm:$0xff]
        %v399 = vld [vmem:[%s366] sm:$0xf]
        %v401 = vlaneseq
        %v402 = vshrl.u32 %v401, 7
        %v403 = vsub.s32 0, %v402
        %v404 = vrot.slane %v399, %v403
        %v405 = vlaneseq
        %v406 = vshrl.u32 %v405, 7
        %v407 = vsub.s32 1, %v406
        %v408 = vrot.slane %v399, %v407
        %v409 = vlaneseq
        %v410 = vshrl.u32 %v409, 7
        %v411 = vsub.s32 2, %v410
        %v412 = vrot.slane %v399, %v411
        %v413 = vlaneseq
        %v414 = vshrl.u32 %v413, 7
        %v415 = vsub.s32 3, %v414
        %v416 = vrot.slane %v399, %v415
        %v437 = vunpack.c.l.b16 %v383
        %v438 = vunpack.c.h.b16 %v383
        %v439 = vunpack.c.l.b16 %v384
        %v440 = vunpack.c.h.b16 %v384
        %v441 = vunpack.c.l.b16 %v385
        %v442 = vunpack.c.h.b16 %v385
        %v443 = vunpack.c.l.b16 %v386
        %v444 = vunpack.c.h.b16 %v386
        %v445 = vunpack.c.l.b16 %v387
        %v446 = vunpack.c.h.b16 %v387
        %v447 = vunpack.c.l.b16 %v388
        %v448 = vunpack.c.h.b16 %v388
        %v449 = vunpack.c.l.b16 %v389
        %v450 = vunpack.c.h.b16 %v389
        %v451 = vunpack.c.l.b16 %v390
        %v452 = vunpack.c.h.b16 %v390
        %v453 = vunpack.c.l.b16 %v391
        %v454 = vunpack.c.h.b16 %v391
        %v455 = vunpack.c.l.b16 %v392
        %v456 = vunpack.c.h.b16 %v392
        %v457 = vunpack.c.l.b16 %v393
        %v458 = vunpack.c.h.b16 %v393
        %v459 = vunpack.c.l.b16 %v394
        %v460 = vunpack.c.h.b16 %v394
        %v461 = vunpack.c.l.b16 %v395
        %v462 = vunpack.c.h.b16 %v395
        %v463 = vunpack.c.l.b16 %v396
        %v464 = vunpack.c.h.b16 %v396
        %v465 = vunpack.c.l.b16 %v397
        %v466 = vunpack.c.h.b16 %v397
        %v467 = vunpack.c.l.b16 %v398
        %v468 = vunpack.c.h.b16 %v398
        %v469 = vpack.c.b16 %v441, %v437
        %v470 = vpack.c.b16 %v442, %v438
        %v471 = vpack.c.b16 %v443, %v439
        %v472 = vpack.c.b16 %v444, %v440
        %v473 = vpack.c.b16 %v449, %v445
        %v474 = vpack.c.b16 %v450, %v446
        %v475 = vpack.c.b16 %v451, %v447
        %v476 = vpack.c.b16 %v452, %v448
        %v477 = vpack.c.b16 %v457, %v453
        %v478 = vpack.c.b16 %v458, %v454
        %v479 = vpack.c.b16 %v459, %v455
        %v480 = vpack.c.b16 %v460, %v456
        %v481 = vpack.c.b16 %v465, %v461
        %v482 = vpack.c.b16 %v466, %v462
        %v483 = vpack.c.b16 %v467, %v463
        %v484 = vpack.c.b16 %v468, %v464
        %vm501 = vcmask 523264
        %v503 = vsel %vm501, %v382, 0
        %505 = vmatprep.subr.bf16.mxu0 0
        %506 = vmatpush1.bf16.msra.mxu0 0
        %507 = vmatprep.subr.bf16.mxu0 0
        %508 = vmatpush1.bf16.msra.mxu0 0
        %509 = vmatprep.subr.bf16.mxu0 0
        %510 = vmatpush1.bf16.msra.mxu0 0
        %511 = vmatprep.subr.bf16.mxu0 0
        %512 = vmatpush1.bf16.msra.mxu0 0
        %513 = vmatprep.subr.bf16.mxu0 %v482
        %514 = vmatpush1.bf16.msra.mxu0 %v481
        %515 = vmatprep.subr.bf16.mxu0 %v478
        %516 = vmatpush1.bf16.msra.mxu0 %v477
        %517 = vmatprep.subr.bf16.mxu0 %v474
        %518 = vmatpush1.bf16.msra.mxu0 %v473
        %519 = vmatprep.subr.bf16.mxu0 %v470
        %520 = vmatpush1.bf16.msra.mxu0 %v469
        %521 = vmatprep.subr.bf16.mxu0 0
        %522 = vmatpush2.bf16.msra.mxu0 0
        %523 = vmatprep.subr.bf16.mxu0 0
        %524 = vmatpush2.bf16.msra.mxu0 0
        %525 = vmatprep.subr.bf16.mxu0 0
        %526 = vmatpush2.bf16.msra.mxu0 0
        %527 = vmatprep.subr.bf16.mxu0 0
        %528 = vmatpush2.bf16.msra.mxu0 0
        %529 = vmatprep.subr.bf16.mxu0 0
        %530 = vmatpush2.bf16.msra.mxu0 0
        %531 = vmatprep.subr.bf16.mxu0 0
        %532 = vmatpush2.bf16.msra.mxu0 0
        %533 = vmatprep.subr.bf16.mxu0 0
        %534 = vmatpush2.bf16.msra.mxu0 0
        %535 = vmatprep.subr.bf16.mxu0 0
        %536 = vmatpush2.bf16.msra.mxu0 0
        %537 = vmatprep.mubr.bf16.mxu0 0
        %538 = vmatmul.mubr.bf16.gmra.mxu0 %v503
        %v539 = vpop.f32.mrf.mxu0
        %v540 = vadd.f32 %v404, %v539
        %v541 = vpop.f32.mrf.mxu0
        %v542 = vadd.f32 %v408, %v541
        %v543 = vpop.f32.mrf.mxu0
        %v544 = vadd.f32 %v404, %v543
        %v545 = vpop.f32.mrf.mxu0
        %v546 = vadd.f32 %v408, %v545
        %547 = vdwg.mxu0
        %548 = vmatprep.subr.bf16.mxu0 0
        %549 = vmatpush1.bf16.msra.mxu0 0
        %550 = vmatprep.subr.bf16.mxu0 0
        %551 = vmatpush1.bf16.msra.mxu0 0
        %552 = vmatprep.subr.bf16.mxu0 0
        %553 = vmatpush1.bf16.msra.mxu0 0
        %554 = vmatprep.subr.bf16.mxu0 0
        %555 = vmatpush1.bf16.msra.mxu0 0
        %556 = vmatprep.subr.bf16.mxu0 %v484
        %557 = vmatpush1.bf16.msra.mxu0 %v483
        %558 = vmatprep.subr.bf16.mxu0 %v480
        %559 = vmatpush1.bf16.msra.mxu0 %v479
        %560 = vmatprep.subr.bf16.mxu0 %v476
        %561 = vmatpush1.bf16.msra.mxu0 %v475
        %562 = vmatprep.subr.bf16.mxu0 %v472
        %563 = vmatpush1.bf16.msra.mxu0 %v471
        %564 = vmatprep.subr.bf16.mxu0 0
        %565 = vmatpush2.bf16.msra.mxu0 0
        %566 = vmatprep.subr.bf16.mxu0 0
        %567 = vmatpush2.bf16.msra.mxu0 0
        %568 = vmatprep.subr.bf16.mxu0 0
        %569 = vmatpush2.bf16.msra.mxu0 0
        %570 = vmatprep.subr.bf16.mxu0 0
        %571 = vmatpush2.bf16.msra.mxu0 0
        %572 = vmatprep.subr.bf16.mxu0 0
        %573 = vmatpush2.bf16.msra.mxu0 0
        %574 = vmatprep.subr.bf16.mxu0 0
        %575 = vmatpush2.bf16.msra.mxu0 0
        %576 = vmatprep.subr.bf16.mxu0 0
        %577 = vmatpush2.bf16.msra.mxu0 0
        %578 = vmatprep.subr.bf16.mxu0 0
        %579 = vmatpush2.bf16.msra.mxu0 0
        %580 = vmatprep.mubr.bf16.mxu0 0
        %581 = vmatmul.mubr.bf16.gmra.mxu0 %v503
        %v582 = vpop.f32.mrf.mxu0
        %v583 = vadd.f32 %v412, %v582
        %v584 = vpop.f32.mrf.mxu0
        %v585 = vadd.f32 %v416, %v584
        %v586 = vpop.f32.mrf.mxu0
        %v587 = vadd.f32 %v412, %v586
        %v588 = vpop.f32.mrf.mxu0
        %v589 = vadd.f32 %v416, %v588
        %590 = vdwg.mxu0
        %v591 = vld [vmem:[#allocation2] sm:$0xff]
        %v592 = vld [vmem:[#allocation2 + $0x8] sm:$0xff]
        %v593 = vmax.f32 %v540, %v583
        %v594 = vmax.f32 %v542, %v585
        %v595 = vmax.f32 %v593, %v594
        %596 = vmax.xlane.f32.xlu0 %v595
        %v597 = vpop.xlane.xlu0 %596
        %v598 = vmax.f32 %v544, %v587
        %v599 = vmax.f32 %v546, %v589
        %v600 = vmax.f32 %v598, %v599
        %601 = vmax.xlane.f32.xlu0 %v600
        %v602 = vpop.xlane.xlu0 %601
        %v603 = vmax.f32 %v591, %v597
        %v604 = vmax.f32 %v592, %v602
        %v605 = vld [vmem:[#allocation3] sm:$0xff]
        %v606 = vld [vmem:[#allocation3 + $0x8] sm:$0xff]
        %v607 = vsub.f32 %v591, %v603
        %v608 = vsub.f32 %v592, %v604
        %v609 = vmul.f32 %v607, 1.442695
        %v610 = vpow.pop %v609
        %v611 = vmul.f32 %v608, 1.442695
        %v612 = vpow.pop %v611
        %v613 = vmul.f32 %v605, %v610
        %v614 = vmul.f32 %v606, %v612
        %616 = vset.pattern.permute.xlu0 0
        %617 = vperm.xlu0 %616, %v603
        %v618 = vpop.permute.xlu0 %617
        %621 = vset.pattern.permute.xlu0 0
        %622 = vperm.xlu0 %621, %v604
        %v623 = vpop.permute.xlu0 %622
        %v625 = vsub.f32 %v540, %v618
        %v626 = vsub.f32 %v542, %v618
        %v627 = vsub.f32 %v583, %v618
        %v628 = vsub.f32 %v585, %v618
        %v629 = vsub.f32 %v544, %v623
        %v630 = vsub.f32 %v546, %v623
        %v631 = vsub.f32 %v587, %v623
        %v632 = vsub.f32 %v589, %v623
        %v633 = vmul.f32 %v625, 1.442695
        %v634 = vpow.pop %v633
        %v635 = vmul.f32 %v626, 1.442695
        %v636 = vpow.pop %v635
        %v637 = vmul.f32 %v627, 1.442695
        %v638 = vpow.pop %v637
        %v639 = vmul.f32 %v628, 1.442695
        %v640 = vpow.pop %v639
        %v641 = vmul.f32 %v629, 1.442695
        %v642 = vpow.pop %v641
        %v643 = vmul.f32 %v630, 1.442695
        %v644 = vpow.pop %v643
        %v645 = vmul.f32 %v631, 1.442695
        %v646 = vpow.pop %v645
        %v647 = vmul.f32 %v632, 1.442695
        %v648 = vpow.pop %v647
        %v649 = vadd.f32 %v634, %v636
        %v650 = vadd.f32 %v649, %v638
        %v651 = vadd.f32 %v650, %v640
        %652 = vadd.xlane.f32.xlu0 %v651
        %v653 = vpop.xlane.xlu0 %652
        %v654 = vadd.f32 %v642, %v644
        %v655 = vadd.f32 %v654, %v646
        %v656 = vadd.f32 %v655, %v648
        %657 = vadd.xlane.f32.xlu0 %v656
        %v658 = vpop.xlane.xlu0 %657
        %v659 = vadd.f32 %v613, %v653
        %v660 = vadd.f32 %v614, %v658
        %vm661 = vcmask 7168
        %662 = vst.msk [vmem:[#allocation3] sm:$0xff] %vm661, %v659
        %663 = vst.msk [vmem:[#allocation3 + $0x8] sm:$0xff] %vm661, %v660
        %v664 = vlaneseq
        %v665 = vand.u32 %v664, 127
        %v666 = vadd.s32 %v665, 128
        %v667 = vadd.s32 %v665, 256
        %v668 = vadd.s32 %v665, 384
        %s669 = smul.u32 %s25, 512
        %v670 = vstv %s669
        %v671 = vadd.s32 %v665, %v670
        %v672 = vadd.s32 %v666, %v670
        %v673 = vadd.s32 %v667, %v670
        %v674 = vadd.s32 %v668, %v670
        %v675 = vld [vmem:[%s5] sm:$0xff]
        %v676 = vld [vmem:[%s5 + $0x8] sm:$0xff]
        %677 = vset.pattern.permute.xlu0 0
        %678 = vperm.xlu0 %677, %v675
        %v679 = vpop.permute.xlu0 %678
        %680 = vset.pattern.permute.xlu0 0
        %681 = vperm.xlu0 %680, %v676
        %v682 = vpop.permute.xlu0 %681
        %vm683 = vcmp.eq.s32.totalorder %v671, %v679
        %vm684 = vcmp.eq.s32.totalorder %v672, %v679
        %vm685 = vcmp.eq.s32.totalorder %v673, %v679
        %vm686 = vcmp.eq.s32.totalorder %v674, %v679
        %vm687 = vcmp.eq.s32.totalorder %v671, %v682
        %vm688 = vcmp.eq.s32.totalorder %v672, %v682
        %vm689 = vcmp.eq.s32.totalorder %v673, %v682
        %vm690 = vcmp.eq.s32.totalorder %v674, %v682
        %v691 = vsel %vm683, 1, 0
        %v692 = vsel %vm684, 1, 0
        %v693 = vsel %vm685, 1, 0
        %v694 = vsel %vm686, 1, 0
        %v695 = vsel %vm687, 1, 0
        %v696 = vsel %vm688, 1, 0
        %v697 = vsel %vm689, 1, 0
        %v698 = vsel %vm690, 1, 0
        %v699 = vcvt.s32.f32 %v691
        %v700 = vcvt.s32.f32 %v692
        %v701 = vcvt.s32.f32 %v693
        %v702 = vcvt.s32.f32 %v694
        %v703 = vcvt.s32.f32 %v695
        %v704 = vcvt.s32.f32 %v696
        %v705 = vcvt.s32.f32 %v697
        %v706 = vcvt.s32.f32 %v698
        %v707 = vld [vmem:[#allocation4] sm:$0xff]
        %v708 = vld [vmem:[#allocation4 + $0x8] sm:$0xff]
        %v709 = vmul.f32 %v540, %v699
        %v710 = vmul.f32 %v542, %v700
        %v711 = vmul.f32 %v583, %v701
        %v712 = vmul.f32 %v585, %v702
        %v713 = vmul.f32 %v544, %v703
        %v714 = vmul.f32 %v546, %v704
        %v715 = vmul.f32 %v587, %v705
        %v716 = vmul.f32 %v589, %v706
        %v717 = vadd.f32 %v709, %v710
        %v718 = vadd.f32 %v717, %v711
        %v719 = vadd.f32 %v718, %v712
        %720 = vadd.xlane.f32.xlu0 %v719
        %v721 = vpop.xlane.xlu0 %720
        %v722 = vadd.f32 %v713, %v714
        %v723 = vadd.f32 %v722, %v715
        %v724 = vadd.f32 %v723, %v716
        %725 = vadd.xlane.f32.xlu0 %v724
        %v726 = vpop.xlane.xlu0 %725
        %v727 = vadd.f32 %v707, %v721
        %v728 = vadd.f32 %v708, %v726
        %729 = vst.msk [vmem:[#allocation4] sm:$0xff] %vm661, %v727
        %730 = vst.msk [vmem:[#allocation4 + $0x8] sm:$0xff] %vm661, %v728
        %731 = vst.msk [vmem:[#allocation2] sm:$0xff] %vm661, %v603
        %732 = vst.msk [vmem:[#allocation2 + $0x8] sm:$0xff] %vm661, %v604
        %p733 = scmp.eq.s32.totalorder %s25, 1
        // Predicated region
        $region69: #{tpu_custom_call.1} parent=47 // pred_check
          %p734 = pneg %p733
        $region70: #{tpu_custom_call.1} parent=47 // pred_check_branch
          %736 = sbr.rel (%p734) target = $region72
        $region71: #{tpu_custom_call.1} parent=47 // pred_region
          %v737 = vld [vmem:[#allocation2] sm:$0xff]
          %v738 = vld [vmem:[#allocation2 + $0x8] sm:$0xff]
          %v739 = vld [vmem:[#allocation3] sm:$0xff]
          %v740 = vld [vmem:[#allocation3 + $0x8] sm:$0xff]
          %v741 = vlog2.pop %v739
          %v742 = vmul.f32 %v741, 0.6931472
          %v743 = vlog2.pop %v740
          %v744 = vmul.f32 %v743, 0.6931472
          %v745 = vadd.f32 %v737, %v742
          %v746 = vadd.f32 %v738, %v744
          %v747 = vld [vmem:[#allocation4] sm:$0xff]
          %v748 = vld [vmem:[#allocation4 + $0x8] sm:$0xff]
          %v749 = vsub.f32 %v745, %v747
          %v750 = vsub.f32 %v746, %v748
          %v751 = vsel %vm661, %v749, 0.0
          %v752 = vsel %vm661, %v750, 0.0
          %v753 = vadd.f32 %v751, %v752
          %754 = vadd.xlane.f32.xlu0 %v753
          %v755 = vpop.xlane.xlu0 %754
          %v756 = vrot.slane %v755, 4
          %v757 = vadd.f32 %v755, %v756
          %v758 = vrot.slane %v757, 2
          %v759 = vadd.f32 %v757, %v758
          %v760 = vrot.slane %v759, 1
          %v761 = vadd.f32 %v759, %v760
          %s762 = vtos %v761
          %s763 = smul.f32 %s762, 0.0625
          %vm764 = vcmp.ge.f32.partialorder %v747, %v737
          %vm765 = vcmp.ge.f32.partialorder %v748, %v738
          %v766 = vsel %vm764, 1, 0
          %v767 = vsel %vm765, 1, 0
          %v768 = vcvt.s32.f32 %v766
          %v769 = vcvt.s32.f32 %v767
          %v770 = vsel %vm661, %v768, 0.0
          %v771 = vsel %vm661, %v769, 0.0
          %v772 = vadd.f32 %v770, %v771
          %773 = vadd.xlane.f32.xlu0 %v772
          %v774 = vpop.xlane.xlu0 %773
          %v775 = vrot.slane %v774, 4
          %v776 = vadd.f32 %v774, %v775
          %v777 = vrot.slane %v776, 2
          %v778 = vadd.f32 %v776, %v777
          %v779 = vrot.slane %v778, 1
          %v780 = vadd.f32 %v778, %v779
          %s781 = vtos %v780
          %s782 = smul.f32 %s781, 6.25
          %v783 = vld [vmem:[#allocation5] sm:$0xff]
          %v784 = vld [vmem:[#allocation9] sm:$0xff]
          %v785 = vmul.f32 %v783, %v783
          %v786 = vsel %vm501, %v785, 0.0
          %787 = vadd.xlane.f32.xlu0 %v786
          %v788 = vpop.xlane.xlu0 %787
          %v789 = vmax.f32 %v788, 1e-16
          %v790 = vrsqrt.pop %v789
          %v791 = vmul.f32 %v784, %v784
          %v792 = vsel %vm501, %v791, 0.0
          %793 = vadd.xlane.f32.xlu0 %v792
          %v794 = vpop.xlane.xlu0 %793
          %v795 = vmax.f32 %v794, 1e-16
          %v796 = vrsqrt.pop %v795
          %v797 = vmul.f32 %v783, %v790
          %v798 = vmul.f32 %v784, %v796
          %s799 = sld [smem:[#allocation12]]
          %s800 = smax.f32 %s799, 1e-06
          %s801 = sld [smem:[#allocation12 + $0x1]]
          %v803 = vsel %vm501, %v797, 0
          %v806 = vsel %vm501, %v798, 0
          %808 = vmatprep.subr.mxu0 0.0
          %809 = vmatpush1.xpose.msra.mxu0 0.0
          %810 = vmatprep.subr.mxu0 0.0
          %811 = vmatpush1.xpose.msra.mxu0 0.0
          %812 = vmatprep.subr.mxu0 0.0
          %813 = vmatpush1.xpose.msra.mxu0 0.0
          %814 = vmatprep.subr.mxu0 0.0
          %815 = vmatpush1.xpose.msra.mxu0 0.0
          %816 = vmatprep.subr.mxu0 0.0
          %817 = vmatpush1.xpose.msra.mxu0 0.0
          %818 = vmatprep.subr.mxu0 0.0
          %819 = vmatpush1.xpose.msra.mxu0 0.0
          %820 = vmatprep.subr.mxu0 0.0
          %821 = vmatpush1.xpose.msra.mxu0 0.0
          %822 = vmatprep.subr.mxu0 0.0
          %823 = vmatpush1.xpose.msra.mxu0 0.0
          %824 = vmatprep.subr.mxu0 0.0
          %825 = vmatpush1.xpose.msra.mxu0 0.0
          %826 = vmatprep.subr.mxu0 0.0
          %827 = vmatpush1.xpose.msra.mxu0 0.0
          %828 = vmatprep.subr.mxu0 0.0
          %829 = vmatpush1.xpose.msra.mxu0 0.0
          %830 = vmatprep.subr.mxu0 0.0
          %831 = vmatpush1.xpose.msra.mxu0 0.0
          %832 = vmatprep.subr.mxu0 0.0
          %833 = vmatpush1.xpose.msra.mxu0 0.0
          %834 = vmatprep.subr.mxu0 0.0
          %835 = vmatpush1.xpose.msra.mxu0 0.0
          %836 = vmatprep.subr.mxu0 0.0
          %837 = vmatpush1.xpose.msra.mxu0 0.0
          %838 = vmatprep.subr.mxu0 0.0
          %839 = vmatpush1.xpose.msra.mxu0 %v806
          %840 = vmatprep.subr.mxu0 0.0
          %841 = vmatpush2.xpose.msra.mxu0 0.0
          %842 = vmatprep.subr.mxu0 0.0
          %843 = vmatpush2.xpose.msra.mxu0 0.0
          %844 = vmatprep.subr.mxu0 0.0
          %845 = vmatpush2.xpose.msra.mxu0 0.0
          %846 = vmatprep.subr.mxu0 0.0
          %847 = vmatpush2.xpose.msra.mxu0 0.0
          %848 = vmatprep.subr.mxu0 0.0
          %849 = vmatpush2.xpose.msra.mxu0 0.0
          %850 = vmatprep.subr.mxu0 0.0
          %851 = vmatpush2.xpose.msra.mxu0 0.0
          %852 = vmatprep.subr.mxu0 0.0
          %853 = vmatpush2.xpose.msra.mxu0 0.0
          %854 = vmatprep.subr.mxu0 0.0
          %855 = vmatpush2.xpose.msra.mxu0 0.0
          %856 = vmatprep.subr.mxu0 0.0
          %857 = vmatpush2.xpose.msra.mxu0 0.0
          %858 = vmatprep.subr.mxu0 0.0
          %859 = vmatpush2.xpose.msra.mxu0 0.0
          %860 = vmatprep.subr.mxu0 0.0
          %861 = vmatpush2.xpose.msra.mxu0 0.0
          %862 = vmatprep.subr.mxu0 0.0
          %863 = vmatpush2.xpose.msra.mxu0 0.0
          %864 = vmatprep.subr.mxu0 0.0
          %865 = vmatpush2.xpose.msra.mxu0 0.0
          %866 = vmatprep.subr.mxu0 0.0
          %867 = vmatpush2.xpose.msra.mxu0 0.0
          %868 = vmatprep.subr.mxu0 0.0
          %869 = vmatpush2.xpose.msra.mxu0 0.0
          %870 = vmatprep.subr.mxu0 0.0
          %871 = vmatpush2.xpose.msra.mxu0 0.0
          %872 = vmatprep.mubr.f32.mxu0 0.0
          %873 = vmatmul.mubr.f32.gmra.mxu0 %v803
          %v874 = vpop.f32.mrf.mxu0
          %v875 = vadd.f32 0.0, %v874
          %v876 = vpop.f32.mrf.mxu0
          %877 = vdwg.mxu0
          %v878 = vstv %s800
          %v879 = vmul.f32 %v875, %v878
          %v880 = vstv %s801
          %v881 = vadd.f32 %v879, %v880
          %v882 = vmul.f32 %v797, %v798
          %v883 = vsel %vm501, %v882, 0.0
          %884 = vadd.xlane.f32.xlu0 %v883
          %v885 = vpop.xlane.xlu0 %884
          %v886 = vmul.f32 %v885, %v878
          %v887 = vadd.f32 %v886, %v880
          %vm888 = vcmask 64512
          %v889 = vsel %vm888, %v881, -inf
          %890 = vmax.xlane.f32.xlu0 %v889
          %v891 = vpop.xlane.xlu0 %890
          %v892 = vsub.f32 %v881, %v891
          %v893 = vmul.f32 %v892, 1.442695
          %v894 = vpow.pop %v893
          %v895 = vsel %vm888, %v894, 0.0
          %896 = vadd.xlane.f32.xlu0 %v895
          %v897 = vpop.xlane.xlu0 %896
          %v898 = vlog2.pop %v897
          %v899 = vmul.f32 %v898, 0.6931472
          %v900 = vadd.f32 %v891, %v899
          %v901 = vsub.f32 %v900, %v887
          %v902 = vsel %vm661, %v901, 0.0
          %903 = vadd.xlane.f32.xlu0 %v902
          %v904 = vpop.xlane.xlu0 %903
          %v905 = vrot.slane %v904, 4
          %v906 = vadd.f32 %v904, %v905
          %v907 = vrot.slane %v906, 2
          %v908 = vadd.f32 %v906, %v907
          %v909 = vrot.slane %v908, 1
          %v910 = vadd.f32 %v908, %v909
          %s911 = vtos %v910
          %s912 = smul.f32 %s911, 0.125
          %s913 = sadd.f32 %s763, %s912
          %s914 = scalar_lea.smem [#allocation13], 0
          %915 = sst [smem:[%s914]] %s913
          %s916 = scalar_lea.smem [#allocation14], 0
          %917 = sst [smem:[%s916]] %s782
        $region72: #{tpu_custom_call.1} parent=47 // pred_fallthru
          _
        // Predicated region
        $region73: #{tpu_custom_call.1} parent=47 // pred_check
          %p918 = pneg %p195
        $region74: #{tpu_custom_call.1} parent=47 // pred_check_branch
          %920 = sbr.rel (%p918) target = $region76
        $region75: #{tpu_custom_call.1} parent=47 // pred_region
          %s922 = ssub.s32 16, 16
          %923 = vsyncadd [#allocation7], %s922
          %926 = dma.smem_to_hbm [#allocation13], 16, %s7, [#allocation7]
        $region76: #{tpu_custom_call.1} parent=47 // pred_fallthru
          _
        // Predicated region
        $region77: #{tpu_custom_call.1} parent=47 // pred_check
          %p927 = pneg %p216
        $region78: #{tpu_custom_call.1} parent=47 // pred_check_branch
          %929 = sbr.rel (%p927) target = $region80
        $region79: #{tpu_custom_call.1} parent=47 // pred_region
          %s931 = ssub.s32 16, 16
          %932 = vsyncadd [#allocation15], %s931
          %935 = dma.smem_to_hbm [#allocation14], 16, %s8, [#allocation15]
        $region80: #{tpu_custom_call.1} parent=47 // pred_fallthru
          _
        // Predicated region
        $region81: #{tpu_custom_call.1} parent=47 // pred_check
          %p936 = pneg %p195
        $region82: #{tpu_custom_call.1} parent=47 // pred_check_branch
          %938 = sbr.rel (%p936) target = $region84
        $region83: #{tpu_custom_call.1} parent=47 // pred_region
          %939 = dma.done [#allocation7], 16
        $region84: #{tpu_custom_call.1} parent=47 // pred_fallthru
          _
        // Predicated region
        $region85: #{tpu_custom_call.1} parent=47 // pred_check
          %p940 = pneg %p216
        $region86: #{tpu_custom_call.1} parent=47 // pred_check_branch
          %942 = sbr.rel (%p940) target = $region88
        $region87: #{tpu_custom_call.1} parent=47 // pred_region
          %943 = dma.done [#allocation15], 16
        $region88: #{tpu_custom_call.1} parent=47 // pred_fallthru
          _
        %944 = sfence
      $region48: #{tpu_custom_call.1} parent=5 // pred_fallthru
        _
      %p945 = scmp.le.s32.totalorder 2, %s20
      // Predicated region
      $region89: #{tpu_custom_call.1} parent=5 // pred_check
        %p946 = pneg %p945
      $region90: #{tpu_custom_call.1} parent=5 // pred_check_branch
        %948 = sbr.rel (%p946) target = $region92
      $region91: #{tpu_custom_call.1} parent=5 // pred_region
        %s949 = ssub.s32 %s20, 2
      $region92: #{tpu_custom_call.1} parent=5 // pred_fallthru
        _
    $region6: #{tpu_custom_call.1} parent=1 // loop_footer
      %s24 = sadd.s32 1, %s20
    $region7: #{tpu_custom_call.1} parent=1 // loop_footer_branch
      %19 = sbr.rel target = $region3
    $region8: #{tpu_custom_call.1} parent=1 // loop_exit
      _
    %950 = vsyncpa [#allocation6], 1
    %s951 = scalar_lea.sflag [#allocation6], 1
    %952 = vsyncpa %s951, 1
    %953 = vsyncpa [#allocation10], 1
    %954 = vsyncpa [#allocation7], 1
    %s955 = scalar_lea.sflag [#allocation7], 1
    %956 = vsyncpa %s955, 1
    %957 = vsyncpa [#allocation15], 1
    %958 = vsyncpa [#allocation8], 1
    %s959 = scalar_lea.sflag [#allocation8], 1
    %960 = vsyncpa %s959, 1

</llo_original>
